<compile_context>
chip_gen: v5e
topology: v5e:2x2
jax: 0.10.0
libtpu: 0.0.40
codegen_flags: <defaults>
</compile_context>

<pallas_src>
import functools

import jax
import jax.numpy as jnp
from jax.experimental import pallas as pl
from jax.experimental.pallas import tpu as pltpu


# Packed, lane-aligned operand dimensions.
_PATCH = 192     # 16 output pixels * 12 (ic*4 + kh*2 + kw)
_HID = 160       # conv-flat width, PyTorch NCHW flatten order c*16 + (oh*4+ow)
_ONES_COL = 192  # column of the packed patches carrying the constant 1 (bias lane)
_K1 = 256        # patches width: 192 + 1 bias lane, padded to 256
_N1 = 256        # stage-1 output width: 160 + 1 ones lane, padded to 256
_N2 = 128        # lane-dense output width (2 real logits, rest zero)


def _mynet_kernel(patches_ref, w1_ref, w2_ref, out_ref):
    # Stage 1: Conv2d(3,10,2,stride=2) + bias + ReLU as ONE MXU matmul against a
    # block-diagonal im2col weight (conv bias folded in via the ones lane).
    h = jnp.dot(patches_ref[...], w1_ref[...],
                preferred_element_type=jnp.float32)
    h = jnp.maximum(h, 0.0)  # ReLU; the ones lane survives (relu(1) == 1)

    # Stage 2: fc1 -> seq[0] -> seq[1] folded into a single (hidden, 128) weight,
    # with the folded bias carried by the ones lane.  Output is lane-dense.
    out_ref[...] = jnp.dot(h, w2_ref[...], preferred_element_type=jnp.float32)


def prepare_params(params):
    """One-time weight packing (hoisted out of the per-forward-call path)."""
    f32 = jnp.float32
    wc = params["conv_w"].reshape(10, 12).astype(f32)   # r = ic*4 + kh*2 + kw
    bc = params["conv_b"].astype(f32)                   # (10,)
    fc1_w = params["fc1_w"].astype(f32)                 # (5, 160)
    fc1_b = params["fc1_b"].astype(f32)
    w0, b0 = params["seq0_w"].astype(f32), params["seq0_b"].astype(f32)
    w1, b1 = params["seq1_w"].astype(f32), params["seq1_b"].astype(f32)

    # Block-diagonal conv weight: wbig[p*12 + r, c*16 + q] = wc[c, r] * (p == q),
    # so (patches @ wbig)[b, c*16+q] == conv output at (channel c, pixel q),
    # i.e. exactly PyTorch's NCHW view(-1) ordering.
    wbig = jnp.einsum("rc,pq->prcq", wc.T, jnp.eye(16, dtype=f32))
    wbig = wbig.reshape(_PATCH, _HID)
    bc_row = jnp.broadcast_to(bc[:, None], (10, 16)).reshape(_HID)

    # Fold fc1 -> seq0 -> seq1 into one (2, 160) affine map.
    w_eff = w1 @ w0 @ fc1_w                              # (2, 160)
    b_eff = w1 @ (w0 @ fc1_b + b0) + b1                  # (2,)

    w1_aug = jnp.zeros((_K1, _N1), f32)
    w1_aug = w1_aug.at[:_PATCH, :_HID].set(wbig)
    w1_aug = w1_aug.at[_ONES_COL, :_HID].set(bc_row)     # conv bias
    w1_aug = w1_aug.at[_ONES_COL, _HID].set(1.0)         # carry the ones lane

    w2_aug = jnp.zeros((_N1, _N2), f32)
    w2_aug = w2_aug.at[:_HID, :2].set(w_eff.T)
    w2_aug = w2_aug.at[_HID, :2].set(b_eff)              # folded biases
    return w1_aug, w2_aug


@functools.partial(jax.jit, static_argnames=("block_b",))
def mynet_forward(x, w1_aug, w2_aug, *, block_b=8):
    """x: (B, 3, 8, 8) float32 NCHW.  Returns (B, 2): per-example MyNet forward."""
    B = x.shape[0]
    # im2col for the non-overlapping 2x2 / stride-2 conv: cols = p*12 + r.
    p = x.astype(jnp.float32).reshape(B, 3, 4, 2, 4, 2)  # (b, ic, oh, kh, ow, kw)
    p = p.transpose(0, 2, 4, 1, 3, 5)                    # (b, oh, ow, ic, kh, kw)
    patches = p.reshape(B, _PATCH)

    b_pad = ((B + block_b - 1) // block_b) * block_b
    packed = jnp.zeros((b_pad, _K1), jnp.float32)
    packed = packed.at[:B, :_PATCH].set(patches)
    packed = packed.at[:B, _ONES_COL].set(1.0)           # bias-carrying ones lane

    out = pl.pallas_call(
        _mynet_kernel,
        out_shape=jax.ShapeDtypeStruct((b_pad, _N2), jnp.float32),
        grid=(b_pad // block_b,),
        in_specs=[
            pl.BlockSpec((block_b, _K1), lambda i: (i, 0)),
            pl.BlockSpec((_K1, _N1), lambda i: (0, 0)),
            pl.BlockSpec((_N1, _N2), lambda i: (0, 0)),
        ],
        out_specs=pl.BlockSpec((block_b, _N2), lambda i: (i, 0)),
        compiler_params=pltpu.CompilerParams(
            dimension_semantics=("parallel",)),
    )(packed, w1_aug, w2_aug)
    return out[:B, :2]


def mynet_ref(x, p):
    """Pure-JAX reference mirroring the PyTorch forward, applied per example."""
    out = jax.lax.conv_general_dilated(
        x, p["conv_w"], window_strides=(2, 2), padding="VALID",
        dimension_numbers=("NCHW", "OIHW", "NCHW"))
    out = out + p["conv_b"][None, :, None, None]
    out = jnp.maximum(out, 0.0)                          # (B, 10, 4, 4)
    flat = out.reshape(out.shape[0], -1)                 # per-example NCHW flatten
    h = flat @ p["fc1_w"].T + p["fc1_b"]
    h = h @ p["seq0_w"].T + p["seq0_b"]
    h = h @ p["seq1_w"].T + p["seq1_b"]
    return h                                             # (B, 2)


if __name__ == "__main__":
    key = jax.random.PRNGKey(0)
    ks = jax.random.split(key, 9)
    params = {
        "conv_w": 0.1 * jax.random.normal(ks[0], (10, 3, 2, 2), jnp.float32),
        "conv_b": 0.1 * jax.random.normal(ks[1], (10,), jnp.float32),
        "fc1_w":  0.1 * jax.random.normal(ks[2], (5, 160), jnp.float32),
        "fc1_b":  0.1 * jax.random.normal(ks[3], (5,), jnp.float32),
        "seq0_w": 0.1 * jax.random.normal(ks[4], (3, 5), jnp.float32),
        "seq0_b": 0.1 * jax.random.normal(ks[5], (3,), jnp.float32),
        "seq1_w": 0.1 * jax.random.normal(ks[6], (2, 3), jnp.float32),
        "seq1_b": 0.1 * jax.random.normal(ks[7], (2,), jnp.float32),
    }
    B = 16
    x = jax.random.normal(ks[8], (B, 3, 8, 8), jnp.float32)

    w1_aug, w2_aug = prepare_params(params)      # one-time weight packing
    y = mynet_forward(x, w1_aug, w2_aug, block_b=8)
    jax.block_until_ready(y)

    y_ref = mynet_ref(x, params)
    assert y.shape == (B, 2)
    assert jnp.allclose(y, y_ref, rtol=1e-4, atol=1e-4), (y, y_ref)
    print("KERNEL_OK")
</pallas_src>

<mosaic_0001>
module attributes {stable_mosaic.version = 11 : i64} {
  func.func @_mynet_kernel(%arg0: i32, %arg1: memref<8x256xf32, #tpu.memory_space<vmem>>, %arg2: memref<256x256xf32, #tpu.memory_space<vmem>>, %arg3: memref<256x128xf32, #tpu.memory_space<vmem>>, %arg4: memref<8x128xf32, #tpu.memory_space<vmem>>) attributes {dimension_semantics = [#tpu.dimension_semantics<parallel>], iteration_bounds = array<i64: 2>, scalar_prefetch = 0 : i64, scratch_operands = 0 : i64, tpu.core_type = #tpu.core_type<tc>, window_params = [{transform_indices = @transform_0, window_bounds = array<i64: 8, 256>}, {pipeline_mode = #tpu.pipeline_mode<synchronous>, transform_indices = @transform_1, window_bounds = array<i64: 256, 256>}, {pipeline_mode = #tpu.pipeline_mode<synchronous>, transform_indices = @transform_2, window_bounds = array<i64: 256, 128>}, {transform_indices = @transform_3, window_bounds = array<i64: 8, 128>}]} {
    %c0 = arith.constant 0 : index
    %c0_0 = arith.constant 0 : index
    %0 = vector.load %arg1[%c0, %c0_0] : memref<8x256xf32, #tpu.memory_space<vmem>>, vector<8x256xf32>
    %c0_1 = arith.constant 0 : index
    %c0_2 = arith.constant 0 : index
    %1 = vector.load %arg2[%c0_1, %c0_2] : memref<256x256xf32, #tpu.memory_space<vmem>>, vector<256x256xf32>
    %cst = arith.constant dense<0.000000e+00> : vector<8x256xf32>
    %2 = tpu.matmul %0, %1, %cst {dimension_numbers = #tpu.dot_dimension_numbers<[1], [0], [0], [1], [0, 0, 1, 1], [], []>} : vector<8x256xf32>, vector<256x256xf32>, vector<8x256xf32> -> vector<8x256xf32>
    %cst_3 = arith.constant 0.000000e+00 : f32
    %3 = vector.broadcast %cst_3 : f32 to vector<8x256xf32>
    %4 = arith.maximumf %2, %3 : vector<8x256xf32>
    %c0_4 = arith.constant 0 : index
    %c0_5 = arith.constant 0 : index
    %5 = vector.load %arg3[%c0_4, %c0_5] : memref<256x128xf32, #tpu.memory_space<vmem>>, vector<256x128xf32>
    %cst_6 = arith.constant dense<0.000000e+00> : vector<8x128xf32>
    %6 = tpu.matmul %4, %5, %cst_6 {dimension_numbers = #tpu.dot_dimension_numbers<[1], [0], [0], [1], [0, 0, 1, 1], [], []>} : vector<8x256xf32>, vector<256x128xf32>, vector<8x128xf32> -> vector<8x128xf32>
    %c0_7 = arith.constant 0 : index
    %c0_8 = arith.constant 0 : index
    %7 = vector.load %arg4[%c0_7, %c0_8] : memref<8x128xf32, #tpu.memory_space<vmem>>, vector<8x128xf32>
    tpu.vector_store %arg4[%c0_7, %c0_8], %6 {strides = array<i32>} : memref<8x128xf32, #tpu.memory_space<vmem>>, vector<8x128xf32>,
    return
  }
  func.func @transform_0(%arg0: i32) -> (i32, i32) {
    %c0_i32 = arith.constant 0 : i32
    %c0_i32_0 = arith.constant 0 : i32
    return %arg0, %c0_i32 : i32, i32
  }
  func.func @transform_1(%arg0: i32) -> (i32, i32) {
    %c0_i32 = arith.constant 0 : i32
    %c0_i32_0 = arith.constant 0 : i32
    %c0_i32_1 = arith.constant 0 : i32
    return %c0_i32, %c0_i32_0 : i32, i32
  }
  func.func @transform_2(%arg0: i32) -> (i32, i32) {
    %c0_i32 = arith.constant 0 : i32
    %c0_i32_0 = arith.constant 0 : i32
    %c0_i32_1 = arith.constant 0 : i32
    return %c0_i32, %c0_i32_0 : i32, i32
  }
  func.func @transform_3(%arg0: i32) -> (i32, i32) {
    %c0_i32 = arith.constant 0 : i32
    %c0_i32_0 = arith.constant 0 : i32
    return %arg0, %c0_i32 : i32, i32
  }
}

</mosaic_0001>

<llo_original>
// kernel: mynet_forward.1
$region0: #{mynet_forward.1}
  #allocation0 [shape = 'u32[]', space=smem, size = 0x4, offset = 0x4, fixed_abs, tag = 'smem constant byte address 0x4 - core index']
  #allocation1 [shape = 'u32[72,128]{1,0:T(1,128)}', space=vmem, size = 0x9000, scoped, tag = 'internal scratch']
  %s0 = inlined_call_operand.vmem [shape: f32[16,256], index: 0, kind: input, shape index: {}]
  %s1 = inlined_call_operand.vmem [shape: f32[256,256], index: 1, kind: input, shape index: {}]
  %s2 = inlined_call_operand.vmem [shape: f32[256,128], index: 2, kind: input, shape index: {}]
  %s3 = inlined_call_operand.vmem [shape: f32[16,128], index: 3, kind: output, shape index: {}]
  %s4 = sld [smem:[#allocation0]]
  $region45: #{mynet_forward.1} parent=0
    _
  %s6 = ssub.s32 1, %s4
  %s7 = scalar_select 0, %s6, %s4
  loop: start=0, step=1, limit=4
  $region2: #{mynet_forward.1} parent=0 // loop_pre_header
    _
  $region3: #{mynet_forward.1} parent=0 // loop_header
    %s9 = sphi 0, %s13
    %p10 = scmp.ge.s32.totalorder %s9, 4
    %s19 = sphi 0, %s21
    %s22 = sphi 0, %s19
    %s23 = sphi 0, %s22
    %s39 = sphi 0, %s23
    %s43 = sphi 0, %s43
    %s45 = sphi 0, %s43
    %s46 = sphi 0, %s45
    %s60 = sphi 0, %s46
    %s64 = sphi 0, %s64
    %s66 = sphi 0, %s64
    %s67 = sphi 0, %s66
    %s81 = sphi 0, %s67
    %s87 = sphi 0, %s89
    %s90 = sphi 0, %s87
    %s91 = sphi 0, %s90
    %s107 = sphi 0, %s91
  $region4: #{mynet_forward.1} parent=0 // loop_header_branch
    %12 = sbr.rel (%p10) target = $region8
  $region5: #{mynet_forward.1} parent=0 // loop_body
    %s14 = ssub.s32 %s9, 1
    %s15 = ssub.s32 %s9, 2
    %s16 = sadd.s32 %s9, 1
    %s17 = ssub.s32 %s9, %s16
    %p18 = scmp.eq.s32.totalorder %s17, 0
    %s20 = sadd.s32 %s19, 1
    %s21 = scalar_select %p18, %s19, %s20
    %p24 = pneg %p18
    %p25 = scmp.eq.s32.totalorder %s9, 1
    %p26 = por %p24, %p25
    %p27 = scmp.ne.s32.totalorder %s19, %s22
    %p28 = scmp.eq.s32.totalorder %s9, 0
    %p29 = por %p27, %p28
    %p30 = scmp.ne.s32.totalorder %s19, %s22
    %p31 = scmp.eq.s32.totalorder %s14, 1
    %p32 = por %p30, %p31
    %p33 = scmp.ne.s32.totalorder %s22, %s23
    %p34 = scmp.eq.s32.totalorder %s14, 0
    %p35 = por %p33, %p34
    %p36 = scmp.ne.s32.totalorder %s22, %s23
    %p37 = scmp.eq.s32.totalorder %s15, 1
    %p38 = por %p36, %p37
    %p40 = scmp.ne.s32.totalorder %s23, %s39
    %p41 = scmp.eq.s32.totalorder %s15, 0
    %p42 = por %p40, %p41
    %s44 = sadd.s32 %s43, 1
    %p47 = scmp.eq.s32.totalorder %s9, 1
    %p48 = scmp.ne.s32.totalorder %s43, %s45
    %p49 = scmp.eq.s32.totalorder %s9, 0
    %p50 = por %p48, %p49
    %p51 = scmp.ne.s32.totalorder %s43, %s45
    %p52 = scmp.eq.s32.totalorder %s14, 1
    %p53 = por %p51, %p52
    %p54 = scmp.ne.s32.totalorder %s45, %s46
    %p55 = scmp.eq.s32.totalorder %s14, 0
    %p56 = por %p54, %p55
    %p57 = scmp.ne.s32.totalorder %s45, %s46
    %p58 = scmp.eq.s32.totalorder %s15, 1
    %p59 = por %p57, %p58
    %p61 = scmp.ne.s32.totalorder %s46, %s60
    %p62 = scmp.eq.s32.totalorder %s15, 0
    %p63 = por %p61, %p62
    %s65 = sadd.s32 %s64, 1
    %p68 = scmp.eq.s32.totalorder %s9, 1
    %p69 = scmp.ne.s32.totalorder %s64, %s66
    %p70 = scmp.eq.s32.totalorder %s9, 0
    %p71 = por %p69, %p70
    %p72 = scmp.ne.s32.totalorder %s64, %s66
    %p73 = scmp.eq.s32.totalorder %s14, 1
    %p74 = por %p72, %p73
    %p75 = scmp.ne.s32.totalorder %s66, %s67
    %p76 = scmp.eq.s32.totalorder %s14, 0
    %p77 = por %p75, %p76
    %p78 = scmp.ne.s32.totalorder %s66, %s67
    %p79 = scmp.eq.s32.totalorder %s15, 1
    %p80 = por %p78, %p79
    %p82 = scmp.ne.s32.totalorder %s67, %s81
    %p83 = scmp.eq.s32.totalorder %s15, 0
    %p84 = por %p82, %p83
    %s85 = ssub.s32 %s9, %s16
    %p86 = scmp.eq.s32.totalorder %s85, 0
    %s88 = sadd.s32 %s87, 1
    %s89 = scalar_select %p86, %s87, %s88
    %p92 = pneg %p86
    %p93 = scmp.eq.s32.totalorder %s9, 1
    %p94 = por %p92, %p93
    %p95 = scmp.ne.s32.totalorder %s87, %s90
    %p96 = scmp.eq.s32.totalorder %s9, 0
    %p97 = por %p95, %p96
    %p98 = scmp.ne.s32.totalorder %s87, %s90
    %p99 = scmp.eq.s32.totalorder %s14, 1
    %p100 = por %p98, %p99
    %p101 = scmp.ne.s32.totalorder %s90, %s91
    %p102 = scmp.eq.s32.totalorder %s14, 0
    %p103 = por %p101, %p102
    %p104 = scmp.ne.s32.totalorder %s90, %s91
    %p105 = scmp.eq.s32.totalorder %s15, 1
    %p106 = por %p104, %p105
    %p108 = scmp.ne.s32.totalorder %s91, %s107
    %p109 = scmp.eq.s32.totalorder %s15, 0
    %p110 = por %p108, %p109
    %p111 = scmp.le.s32.totalorder 1, %s9
    %p112 = scmp.lt.s32.totalorder %s9, 3
    %p113 = pnand %p111, %p112
    %p114 = pneg %p113
    // Predicated region
    $region9: #{mynet_forward.1} parent=5 // pred_check
      _
    $region10: #{mynet_forward.1} parent=5 // pred_check_branch
      %116 = sbr.rel (%p113) target = $region12
    $region11: #{mynet_forward.1} parent=5 // pred_region
      %s117 = ssub.s32 %s9, 1
      // Predicated region
      $region13: #{mynet_forward.1} parent=11 // pred_check
        %p118 = pneg %p56
      $region14: #{mynet_forward.1} parent=11 // pred_check_branch
        %120 = sbr.rel (%p118) target = $region16
      $region15: #{mynet_forward.1} parent=11 // pred_region
        _
      $region16: #{mynet_forward.1} parent=11 // pred_fallthru
        _
      // Predicated region
      $region17: #{mynet_forward.1} parent=11 // pred_check
        %p121 = pneg %p77
      $region18: #{mynet_forward.1} parent=11 // pred_check_branch
        %123 = sbr.rel (%p121) target = $region20
      $region19: #{mynet_forward.1} parent=11 // pred_region
        _
      $region20: #{mynet_forward.1} parent=11 // pred_fallthru
        _
    $region12: #{mynet_forward.1} parent=5 // pred_fallthru
      _
    %p124 = scmp.lt.s32.totalorder %s9, 2
    // Predicated region
    $region21: #{mynet_forward.1} parent=5 // pred_check
      %p125 = pneg %p124
    $region22: #{mynet_forward.1} parent=5 // pred_check_branch
      %127 = sbr.rel (%p125) target = $region24
    $region23: #{mynet_forward.1} parent=5 // pred_region
      // Predicated region
      $region25: #{mynet_forward.1} parent=23 // pred_check
        %p128 = pneg %p29
      $region26: #{mynet_forward.1} parent=23 // pred_check_branch
        %130 = sbr.rel (%p128) target = $region28
      $region27: #{mynet_forward.1} parent=23 // pred_region
        %p131 = scmp.lt.s32.totalorder %s9, 1
        %s132 = scalar_select %p131, %s9, 1
        %s133 = smul.addr %s132, 2
        %s134 = smul.addr %s133, 8
        %s135 = scalar_lea.vmem %s0, %s134
      $region28: #{mynet_forward.1} parent=23 // pred_fallthru
        _
    $region24: #{mynet_forward.1} parent=5 // pred_fallthru
      _
    %p136 = scmp.le.s32.totalorder 1, %s9
    %p137 = scmp.lt.s32.totalorder %s9, 3
    %p138 = pnand %p136, %p137
    %p139 = pneg %p138
    // Predicated region
    $region29: #{mynet_forward.1} parent=5 // pred_check
      _
    $region30: #{mynet_forward.1} parent=5 // pred_check_branch
      %141 = sbr.rel (%p138) target = $region32
    $region31: #{mynet_forward.1} parent=5 // pred_region
      %s142 = ssub.s32 %s9, 1
      %p143 = scmp.lt.s32.totalorder %s14, 1
      %s144 = scalar_select %p143, %s14, 1
      %s145 = smul.addr %s144, 2
      %s146 = smul.addr %s145, 8
      %s147 = scalar_lea.vmem %s0, %s146
      %p148 = pneg %p35
      %p149 = pneg %p32
      %p150 = pneg %p56
      %p151 = pneg %p53
      %p152 = pneg %p77
      %p153 = pneg %p74
      %p154 = pneg %p103
      %p155 = pneg %p100
      %p156 = scmp.lt.s32.totalorder %s14, 1
      %s157 = scalar_select %p156, %s14, 1
      %s158 = smul.addr %s157, 8
      %s159 = scalar_lea.vmem %s3, %s158
      %p160 = scmp.lt.s32.totalorder %s14, 1
      %s161 = scalar_select %p160, %s14, 1
      %s162 = smul.addr %s161, 2
      %s163 = smul.addr %s162, 8
      %s164 = scalar_lea.vmem %s0, %s163
      %p165 = scmp.lt.s32.totalorder %s14, 1
      %s166 = scalar_select %p165, %s14, 1
      %s167 = smul.addr %s166, 8
      %s168 = scalar_lea.vmem %s3, %s167
      %v169 = vld [vmem:[%s164] sm:$0xff]
      %v170 = vld [vmem:[%s164 + $0x8] sm:$0xff]
      %v171 = vld [vmem:[%s1] sm:$0xff]
      %v172 = vld [vmem:[%s1 + $0x8] sm:$0xff]
      %v173 = vld [vmem:[%s1 + $0x10] sm:$0xff]
      %v174 = vld [vmem:[%s1 + $0x18] sm:$0xff]
      %v175 = vld [vmem:[%s1 + $0x20] sm:$0xff]
      %v176 = vld [vmem:[%s1 + $0x28] sm:$0xff]
      %v177 = vld [vmem:[%s1 + $0x30] sm:$0xff]
      %v178 = vld [vmem:[%s1 + $0x38] sm:$0xff]
      %v179 = vld [vmem:[%s1 + $0x40] sm:$0xff]
      %v180 = vld [vmem:[%s1 + $0x48] sm:$0xff]
      %v181 = vld [vmem:[%s1 + $0x50] sm:$0xff]
      %v182 = vld [vmem:[%s1 + $0x58] sm:$0xff]
      %v183 = vld [vmem:[%s1 + $0x60] sm:$0xff]
      %v184 = vld [vmem:[%s1 + $0x68] sm:$0xff]
      %v185 = vld [vmem:[%s1 + $0x70] sm:$0xff]
      %v186 = vld [vmem:[%s1 + $0x78] sm:$0xff]
      %v187 = vld [vmem:[%s1 + $0x80] sm:$0xff]
      %v188 = vld [vmem:[%s1 + $0x88] sm:$0xff]
      %v189 = vld [vmem:[%s1 + $0x90] sm:$0xff]
      %v190 = vld [vmem:[%s1 + $0x98] sm:$0xff]
      %v191 = vld [vmem:[%s1 + $0xa0] sm:$0xff]
      %v192 = vld [vmem:[%s1 + $0xa8] sm:$0xff]
      %v193 = vld [vmem:[%s1 + $0xb0] sm:$0xff]
      %v194 = vld [vmem:[%s1 + $0xb8] sm:$0xff]
      %v195 = vld [vmem:[%s1 + $0xc0] sm:$0xff]
      %v196 = vld [vmem:[%s1 + $0xc8] sm:$0xff]
      %v197 = vld [vmem:[%s1 + $0xd0] sm:$0xff]
      %v198 = vld [vmem:[%s1 + $0xd8] sm:$0xff]
      %v199 = vld [vmem:[%s1 + $0xe0] sm:$0xff]
      %v200 = vld [vmem:[%s1 + $0xe8] sm:$0xff]
      %v201 = vld [vmem:[%s1 + $0xf0] sm:$0xff]
      %v202 = vld [vmem:[%s1 + $0xf8] sm:$0xff]
      %v203 = vld [vmem:[%s1 + $0x100] sm:$0xff]
      %v204 = vld [vmem:[%s1 + $0x108] sm:$0xff]
      %v205 = vld [vmem:[%s1 + $0x110] sm:$0xff]
      %v206 = vld [vmem:[%s1 + $0x118] sm:$0xff]
      %v207 = vld [vmem:[%s1 + $0x120] sm:$0xff]
      %v208 = vld [vmem:[%s1 + $0x128] sm:$0xff]
      %v209 = vld [vmem:[%s1 + $0x130] sm:$0xff]
      %v210 = vld [vmem:[%s1 + $0x138] sm:$0xff]
      %v211 = vld [vmem:[%s1 + $0x140] sm:$0xff]
      %v212 = vld [vmem:[%s1 + $0x148] sm:$0xff]
      %v213 = vld [vmem:[%s1 + $0x150] sm:$0xff]
      %v214 = vld [vmem:[%s1 + $0x158] sm:$0xff]
      %v215 = vld [vmem:[%s1 + $0x160] sm:$0xff]
      %v216 = vld [vmem:[%s1 + $0x168] sm:$0xff]
      %v217 = vld [vmem:[%s1 + $0x170] sm:$0xff]
      %v218 = vld [vmem:[%s1 + $0x178] sm:$0xff]
      %v219 = vld [vmem:[%s1 + $0x180] sm:$0xff]
      %v220 = vld [vmem:[%s1 + $0x188] sm:$0xff]
      %v221 = vld [vmem:[%s1 + $0x190] sm:$0xff]
      %v222 = vld [vmem:[%s1 + $0x198] sm:$0xff]
      %v223 = vld [vmem:[%s1 + $0x1a0] sm:$0xff]
      %v224 = vld [vmem:[%s1 + $0x1a8] sm:$0xff]
      %v225 = vld [vmem:[%s1 + $0x1b0] sm:$0xff]
      %v226 = vld [vmem:[%s1 + $0x1b8] sm:$0xff]
      %v227 = vld [vmem:[%s1 + $0x1c0] sm:$0xff]
      %v228 = vld [vmem:[%s1 + $0x1c8] sm:$0xff]
      %v229 = vld [vmem:[%s1 + $0x1d0] sm:$0xff]
      %v230 = vld [vmem:[%s1 + $0x1d8] sm:$0xff]
      %v231 = vld [vmem:[%s1 + $0x1e0] sm:$0xff]
      %v232 = vld [vmem:[%s1 + $0x1e8] sm:$0xff]
      %v233 = vld [vmem:[%s1 + $0x1f0] sm:$0xff]
      %v234 = vld [vmem:[%s1 + $0x1f8] sm:$0xff]
      %235 = vmatpush.msra.mxu0 %v201
      %236 = vmatpush.msra.mxu0 %v199
      %237 = vmatpush.msra.mxu0 %v197
      %238 = vmatpush.msra.mxu0 %v195
      %239 = vmatpush.msra.mxu0 %v193
      %240 = vmatpush.msra.mxu0 %v191
      %241 = vmatpush.msra.mxu0 %v189
      %242 = vmatpush.msra.mxu0 %v187
      %243 = vmatpush.msra.mxu0 %v185
      %244 = vmatpush.msra.mxu0 %v183
      %245 = vmatpush.msra.mxu0 %v181
      %246 = vmatpush.msra.mxu0 %v179
      %247 = vmatpush.msra.mxu0 %v177
      %248 = vmatpush.msra.mxu0 %v175
      %249 = vmatpush.msra.mxu0 %v173
      %250 = vmatpush.msra.mxu0 %v171
      %251 = vmatmul.f32.gmra.mxu0 %v169
      %v252 = vpop.f32.mrf.mxu0
      %v253 = vadd.f32 0.0, %v252
      %254 = vdwg.mxu0
      %255 = vmatpush.msra.mxu0 %v233
      %256 = vmatpush.msra.mxu0 %v231
      %257 = vmatpush.msra.mxu0 %v229
      %258 = vmatpush.msra.mxu0 %v227
      %259 = vmatpush.msra.mxu0 %v225
      %260 = vmatpush.msra.mxu0 %v223
      %261 = vmatpush.msra.mxu0 %v221
      %262 = vmatpush.msra.mxu0 %v219
      %263 = vmatpush.msra.mxu0 %v217
      %264 = vmatpush.msra.mxu0 %v215
      %265 = vmatpush.msra.mxu0 %v213
      %266 = vmatpush.msra.mxu0 %v211
      %267 = vmatpush.msra.mxu0 %v209
      %268 = vmatpush.msra.mxu0 %v207
      %269 = vmatpush.msra.mxu0 %v205
      %270 = vmatpush.msra.mxu0 %v203
      %271 = vmatmul.f32.gmra.mxu0 %v170
      %v272 = vpop.f32.mrf.mxu0
      %v273 = vadd.f32 %v253, %v272
      %274 = vdwg.mxu0
      %275 = vmatpush.msra.mxu0 %v202
      %276 = vmatpush.msra.mxu0 %v200
      %277 = vmatpush.msra.mxu0 %v198
      %278 = vmatpush.msra.mxu0 %v196
      %279 = vmatpush.msra.mxu0 %v194
      %280 = vmatpush.msra.mxu0 %v192
      %281 = vmatpush.msra.mxu0 %v190
      %282 = vmatpush.msra.mxu0 %v188
      %283 = vmatpush.msra.mxu0 %v186
      %284 = vmatpush.msra.mxu0 %v184
      %285 = vmatpush.msra.mxu0 %v182
      %286 = vmatpush.msra.mxu0 %v180
      %287 = vmatpush.msra.mxu0 %v178
      %288 = vmatpush.msra.mxu0 %v176
      %289 = vmatpush.msra.mxu0 %v174
      %290 = vmatpush.msra.mxu0 %v172
      %291 = vmatmul.f32.gmra.mxu0 %v169
      %v292 = vpop.f32.mrf.mxu0
      %v293 = vadd.f32 0.0, %v292
      %294 = vdwg.mxu0
      %295 = vmatpush.msra.mxu0 %v234
      %296 = vmatpush.msra.mxu0 %v232
      %297 = vmatpush.msra.mxu0 %v230
      %298 = vmatpush.msra.mxu0 %v228
      %299 = vmatpush.msra.mxu0 %v226
      %300 = vmatpush.msra.mxu0 %v224
      %301 = vmatpush.msra.mxu0 %v222
      %302 = vmatpush.msra.mxu0 %v220
      %303 = vmatpush.msra.mxu0 %v218
      %304 = vmatpush.msra.mxu0 %v216
      %305 = vmatpush.msra.mxu0 %v214
      %306 = vmatpush.msra.mxu0 %v212
      %307 = vmatpush.msra.mxu0 %v210
      %308 = vmatpush.msra.mxu0 %v208
      %309 = vmatpush.msra.mxu0 %v206
      %310 = vmatpush.msra.mxu0 %v204
      %311 = vmatmul.f32.gmra.mxu0 %v170
      %v312 = vpop.f32.mrf.mxu0
      %v313 = vadd.f32 %v293, %v312
      %314 = vdwg.mxu0
      %v315 = vmax.f32 %v273, 0.0
      %v316 = vmax.f32 %v313, 0.0
      %v317 = vld [vmem:[%s2] sm:$0xff]
      %v318 = vld [vmem:[%s2 + $0x8] sm:$0xff]
      %v319 = vld [vmem:[%s2 + $0x10] sm:$0xff]
      %v320 = vld [vmem:[%s2 + $0x18] sm:$0xff]
      %v321 = vld [vmem:[%s2 + $0x20] sm:$0xff]
      %v322 = vld [vmem:[%s2 + $0x28] sm:$0xff]
      %v323 = vld [vmem:[%s2 + $0x30] sm:$0xff]
      %v324 = vld [vmem:[%s2 + $0x38] sm:$0xff]
      %v325 = vld [vmem:[%s2 + $0x40] sm:$0xff]
      %v326 = vld [vmem:[%s2 + $0x48] sm:$0xff]
      %v327 = vld [vmem:[%s2 + $0x50] sm:$0xff]
      %v328 = vld [vmem:[%s2 + $0x58] sm:$0xff]
      %v329 = vld [vmem:[%s2 + $0x60] sm:$0xff]
      %v330 = vld [vmem:[%s2 + $0x68] sm:$0xff]
      %v331 = vld [vmem:[%s2 + $0x70] sm:$0xff]
      %v332 = vld [vmem:[%s2 + $0x78] sm:$0xff]
      %v333 = vld [vmem:[%s2 + $0x80] sm:$0xff]
      %v334 = vld [vmem:[%s2 + $0x88] sm:$0xff]
      %v335 = vld [vmem:[%s2 + $0x90] sm:$0xff]
      %v336 = vld [vmem:[%s2 + $0x98] sm:$0xff]
      %v337 = vld [vmem:[%s2 + $0xa0] sm:$0xff]
      %v338 = vld [vmem:[%s2 + $0xa8] sm:$0xff]
      %v339 = vld [vmem:[%s2 + $0xb0] sm:$0xff]
      %v340 = vld [vmem:[%s2 + $0xb8] sm:$0xff]
      %v341 = vld [vmem:[%s2 + $0xc0] sm:$0xff]
      %v342 = vld [vmem:[%s2 + $0xc8] sm:$0xff]
      %v343 = vld [vmem:[%s2 + $0xd0] sm:$0xff]
      %v344 = vld [vmem:[%s2 + $0xd8] sm:$0xff]
      %v345 = vld [vmem:[%s2 + $0xe0] sm:$0xff]
      %v346 = vld [vmem:[%s2 + $0xe8] sm:$0xff]
      %v347 = vld [vmem:[%s2 + $0xf0] sm:$0xff]
      %v348 = vld [vmem:[%s2 + $0xf8] sm:$0xff]
      %349 = vmatpush.msra.mxu0 %v332
      %350 = vmatpush.msra.mxu0 %v331
      %351 = vmatpush.msra.mxu0 %v330
      %352 = vmatpush.msra.mxu0 %v329
      %353 = vmatpush.msra.mxu0 %v328
      %354 = vmatpush.msra.mxu0 %v327
      %355 = vmatpush.msra.mxu0 %v326
      %356 = vmatpush.msra.mxu0 %v325
      %357 = vmatpush.msra.mxu0 %v324
      %358 = vmatpush.msra.mxu0 %v323
      %359 = vmatpush.msra.mxu0 %v322
      %360 = vmatpush.msra.mxu0 %v321
      %361 = vmatpush.msra.mxu0 %v320
      %362 = vmatpush.msra.mxu0 %v319
      %363 = vmatpush.msra.mxu0 %v318
      %364 = vmatpush.msra.mxu0 %v317
      %365 = vmatmul.f32.gmra.mxu0 %v315
      %v366 = vpop.f32.mrf.mxu0
      %v367 = vadd.f32 0.0, %v366
      %368 = vdwg.mxu0
      %369 = vmatpush.msra.mxu0 %v348
      %370 = vmatpush.msra.mxu0 %v347
      %371 = vmatpush.msra.mxu0 %v346
      %372 = vmatpush.msra.mxu0 %v345
      %373 = vmatpush.msra.mxu0 %v344
      %374 = vmatpush.msra.mxu0 %v343
      %375 = vmatpush.msra.mxu0 %v342
      %376 = vmatpush.msra.mxu0 %v341
      %377 = vmatpush.msra.mxu0 %v340
      %378 = vmatpush.msra.mxu0 %v339
      %379 = vmatpush.msra.mxu0 %v338
      %380 = vmatpush.msra.mxu0 %v337
      %381 = vmatpush.msra.mxu0 %v336
      %382 = vmatpush.msra.mxu0 %v335
      %383 = vmatpush.msra.mxu0 %v334
      %384 = vmatpush.msra.mxu0 %v333
      %385 = vmatmul.f32.gmra.mxu0 %v316
      %v386 = vpop.f32.mrf.mxu0
      %v387 = vadd.f32 %v367, %v386
      %388 = vdwg.mxu0
      %389 = vst [vmem:[%s168] sm:$0xff] %v387
      %p390 = scmp.lt.s32.totalorder %s14, 1
      %s391 = scalar_select %p390, %s14, 1
      %s392 = smul.addr %s391, 8
      %s393 = scalar_lea.vmem %s3, %s392
      // Predicated region
      $region33: #{mynet_forward.1} parent=31 // pred_check
        %p394 = pneg %p100
      $region34: #{mynet_forward.1} parent=31 // pred_check_branch
        %396 = sbr.rel (%p394) target = $region36
      $region35: #{mynet_forward.1} parent=31 // pred_region
        _
      $region36: #{mynet_forward.1} parent=31 // pred_fallthru
        _
    $region32: #{mynet_forward.1} parent=5 // pred_fallthru
      _
    %p397 = scmp.le.s32.totalorder 2, %s9
    // Predicated region
    $region37: #{mynet_forward.1} parent=5 // pred_check
      %p398 = pneg %p397
    $region38: #{mynet_forward.1} parent=5 // pred_check_branch
      %400 = sbr.rel (%p398) target = $region40
    $region39: #{mynet_forward.1} parent=5 // pred_region
      %s401 = ssub.s32 %s9, 2
      // Predicated region
      $region41: #{mynet_forward.1} parent=39 // pred_check
        %p402 = pneg %p106
      $region42: #{mynet_forward.1} parent=39 // pred_check_branch
        %404 = sbr.rel (%p402) target = $region44
      $region43: #{mynet_forward.1} parent=39 // pred_region
        %p405 = scmp.lt.s32.totalorder %s15, 1
        %s406 = scalar_select %p405, %s15, 1
        %s407 = smul.addr %s406, 8
        %s408 = scalar_lea.vmem %s3, %s407
      $region44: #{mynet_forward.1} parent=39 // pred_fallthru
        _
    $region40: #{mynet_forward.1} parent=5 // pred_fallthru
      _
  $region6: #{mynet_forward.1} parent=0 // loop_footer
    %s13 = sadd.s32 1, %s9
  $region7: #{mynet_forward.1} parent=0 // loop_footer_branch
    %8 = sbr.rel target = $region3
  $region8: #{mynet_forward.1} parent=0 // loop_exit
    _

</llo_original>
